<compile_context>
chip_gen: v7x
topology: tpu7x:2x2x1
jax: 0.10.0
libtpu: 0.0.40
codegen_flags: <defaults>
</compile_context>

<pallas_src>
import functools

import numpy as np
import jax
import jax.numpy as jnp
from jax.experimental import pallas as pl
from jax.experimental.pallas import tpu as pltpu

TOP_K = 5          # forward() hardcodes torch.topk(freq, 5)
_LANE = 128
_SUBLANE = 8


def _round_up(x, m):
    return (x + m - 1) // m * m


@functools.lru_cache(maxsize=None)
def _dft_weights(T: int, Fpad: int):
    """W = [C | S], C[n,k]=cos(2*pi*n*k/T), S[n,k]=-sin(2*pi*n*k/T), zero-padded."""
    F = T // 2 + 1
    n = np.arange(T, dtype=np.float64)[:, None]
    k = np.arange(F, dtype=np.float64)[None, :]
    ang = 2.0 * np.pi * n * k / T
    W = np.zeros((T, 2 * Fpad), np.float32)
    W[:, :F] = np.cos(ang)
    W[:, Fpad:Fpad + F] = -np.sin(ang)
    return jnp.asarray(W)


def _resident_spec(shape):
    """Constant-index resident weight spec; single-buffered when supported."""
    imap = lambda i: (0, 0)
    try:
        return pl.BlockSpec(shape, imap, pipeline_mode=pl.Buffered(1)), 1
    except Exception:           # pipeline_mode / Buffered unavailable -> default 2x
        return pl.BlockSpec(shape, imap), 2


def _vmem_cap_bytes():
    try:
        phys = int(pltpu.get_tpu_info().vmem_capacity_bytes)
    except Exception:
        phys = 64 << 20         # conservative if query unavailable
    return max(int(phys * 0.8), 32 << 20)


# ----------------------------------------------------------------------------
# Pass 1: rfft (one wide MXU matmul) + per-tile min of per-row 5th-largest |X|^2
# ----------------------------------------------------------------------------
def _rfft_kth_kernel(x_ref, w_ref, kth_ref, *, B, TB, Fpad):
    x = x_ref[...].astype(jnp.float32)                                  # (TB, T)
    reim = jnp.dot(x, w_ref[...], preferred_element_type=jnp.float32)   # (TB, 2*Fpad)
    re = reim[:, :Fpad]
    im = reim[:, Fpad:]
    freq2 = re * re + im * im                                            # |X_k|^2

    tb, fpad = freq2.shape
    row = jax.lax.broadcasted_iota(jnp.int32, (tb, fpad), 0)
    lane = jax.lax.broadcasted_iota(jnp.int32, (tb, fpad), 1)
    grow = pl.program_id(0) * TB + row                                   # global row

    # torch quirk: freq[0] = 0  (zeroes global batch row 0)
    freq2 = jnp.where(grow == 0, 0.0, freq2)
    # padded batch rows must never win the global min of per-row 5th-largest
    work = jnp.where(grow >= B, jnp.inf, freq2)

    # per-row 5th-largest value (with multiplicity): unrolled extract-max,
    # removing exactly one occurrence per step so ties behave like torch.topk.
    kth = jnp.zeros((tb, 1), jnp.float32)
    for _ in range(TOP_K):
        kth = jnp.max(work, axis=-1, keepdims=True)
        is_max = work == kth
        first = jnp.min(jnp.where(is_max, lane, fpad), axis=-1, keepdims=True)
        work = jnp.where(lane == first, -1.0, work)    # freq2 >= 0, so -1 is safe

    kth_ref[...] = jnp.zeros_like(kth_ref) + jnp.min(kth)   # min over tile rows


# ----------------------------------------------------------------------------
# Pass 2: recompute rfft, global-threshold mask, irfft (W reused transposed),
#         trend = x - season
# ----------------------------------------------------------------------------
def _mask_irfft_kernel(thr_ref, x_ref, w_ref, season_ref, trend_ref,
                       *, T, TB, Fpad):
    thr2 = thr_ref[0]                                   # scalar (squared) in SMEM

    x = x_ref[...].astype(jnp.float32)                                   # (TB, T)
    w = w_ref[...]                                                       # (T, 2F)
    reim = jnp.dot(x, w, preferred_element_type=jnp.float32)             # bitwise == pass 1
    re = reim[:, :Fpad]
    im = reim[:, Fpad:]
    freq2 = re * re + im * im

    tb, fpad = freq2.shape
    row = jax.lax.broadcasted_iota(jnp.int32, (tb, fpad), 0)
    col = jax.lax.broadcasted_iota(jnp.int32, (tb, fpad), 1)
    grow = pl.program_id(0) * TB + row
    freq2 = jnp.where(grow == 0, 0.0, freq2)            # same quirk as pass 1

    keep = freq2 > thr2                                 # xf[freq <= thr] = 0

    # fold irfft bin weights w_k / T into the kept coefficients
    wscale = jnp.where((col == 0) | (col == T // 2), 1.0 / T, 2.0 / T)
    m = jnp.where(keep, wscale, 0.0)                                     # (TB, Fpad)
    coeff = reim * jnp.concatenate([m, m], axis=1)                       # (TB, 2*Fpad)

    # x_n = sum_k (w_k/T) * (Re_k cos(2*pi*n*k/T) - Im_k sin(2*pi*n*k/T))
    #     = coeff @ W^T   -- contract dim 1 of coeff against dim 1 of W
    season = jax.lax.dot_general(coeff, w,
                                 dimension_numbers=(((1,), (1,)), ((), ())),
                                 preferred_element_type=jnp.float32)     # (TB, T)

    season_ref[...] = season.astype(season_ref.dtype)
    trend_ref[...] = (x - season).astype(trend_ref.dtype)


# ----------------------------------------------------------------------------
# Wrapper
# ----------------------------------------------------------------------------
def dft_series_decomp(x, *, tb=None):
    B, T = x.shape
    assert T % 2 == 0, "torch.fft.irfft default length needs even T to round-trip"
    F = T // 2 + 1
    assert F >= TOP_K, "need at least 5 rfft bins for topk(freq, 5)"

    Fpad = _round_up(F, _LANE)                 # lane-dense; fused N/K dims are 256-aligned
    isz = 4

    # sublane granularity for the (TB, T) x tile depends on input width
    itemsize = jnp.dtype(x.dtype).itemsize
    sub = {4: _SUBLANE, 2: 16, 1: 32}.get(itemsize, _SUBLANE)

    if tb is None:
        tb = 256 if B >= 256 else B
    TB = max(sub, _round_up(min(tb, max(B, 1)), sub))

    w_spec, w_factor = _resident_spec((T, 2 * Fpad))
    w_bytes = w_factor * T * 2 * Fpad * isz
    cap = _vmem_cap_bytes()
    assert w_bytes + (4 << 20) < cap, (
        "resident DFT weights do not fit VMEM for this T; need frequency-chunked "
        "path (TODO(synk))")

    def _need(TBv):
        stream = 2 * 3 * TBv * T * isz + 2 * _SUBLANE * _LANE * isz   # double-buffered tiles
        tmp = 12 * TBv * Fpad * isz + 4 * TBv * T * isz               # in-kernel f32 temporaries
        return w_bytes + stream + tmp

    while TB > sub and _need(TB) > cap:
        TB = max(sub, _round_up(TB // 2, sub))

    B_pad = _round_up(B, TB)
    nt = B_pad // TB

    W = _dft_weights(T, Fpad)
    x_p = x if B_pad == B else jnp.pad(x, ((0, B_pad - B), (0, 0)))

    vmem_limit = int(min(max(_need(TB) * 1.25, 8 << 20), cap))
    cparams = pltpu.CompilerParams(dimension_semantics=("parallel",),
                                   vmem_limit_bytes=vmem_limit)
    f32 = jnp.float32

    # ---------------- pass 1: rfft + per-tile kth (squared) ------------------
    cost1 = pl.CostEstimate(
        flops=4 * B_pad * T * Fpad,
        transcendentals=0,
        bytes_accessed=(B_pad * T + T * 2 * Fpad + nt * _SUBLANE * _LANE) * isz)

    kth2 = pl.pallas_call(
        functools.partial(_rfft_kth_kernel, B=B, TB=TB, Fpad=Fpad),
        grid=(nt,),
        in_specs=[pl.BlockSpec((TB, T), lambda i: (i, 0)),            # x tile
                  w_spec],                                            # W (resident)
        out_specs=pl.BlockSpec((_SUBLANE, _LANE), lambda i: (i, 0)),  # kth per tile
        out_shape=jax.ShapeDtypeStruct((nt * _SUBLANE, _LANE), f32),
        compiler_params=cparams,
        cost_estimate=cost1,
    )(x_p, W)

    # global threshold == top_k_freq.min() (scalar over all rows), squared domain
    threshold2 = jnp.min(kth2).reshape((1,)).astype(f32)

    # ---------------- pass 2: recompute rfft, mask, irfft, trend -------------
    cost2 = pl.CostEstimate(
        flops=8 * B_pad * T * Fpad,
        transcendentals=0,
        bytes_accessed=(3 * B_pad * T + T * 2 * Fpad) * isz)

    season, trend = pl.pallas_call(
        functools.partial(_mask_irfft_kernel, T=T, TB=TB, Fpad=Fpad),
        grid=(nt,),
        in_specs=[pl.BlockSpec(memory_space=pltpu.MemorySpace.SMEM),  # threshold^2
                  pl.BlockSpec((TB, T), lambda i: (i, 0)),            # x tile
                  w_spec],                                            # W (resident)
        out_specs=(pl.BlockSpec((TB, T), lambda i: (i, 0)),
                   pl.BlockSpec((TB, T), lambda i: (i, 0))),
        out_shape=(jax.ShapeDtypeStruct((B_pad, T), x.dtype),
                   jax.ShapeDtypeStruct((B_pad, T), x.dtype)),
        compiler_params=cparams,
        cost_estimate=cost2,
    )(threshold2, x_p, W)

    if B_pad != B:
        season = season[:B]
        trend = trend[:B]
    return season, trend


def _reference(x):
    """Pure-JAX transcription of the PyTorch forward (for verification)."""
    xf = jnp.fft.rfft(x)
    freq = jnp.abs(xf)
    freq = freq.at[0].set(0.0)                        # freq[0] = 0
    top_k_freq, _ = jax.lax.top_k(freq, TOP_K)
    thr = jnp.min(top_k_freq)
    xf = jnp.where(freq <= thr, jnp.zeros_like(xf), xf)
    season = jnp.fft.irfft(xf)
    trend = x - season
    return season, trend


if __name__ == "__main__":
    key = jax.random.PRNGKey(0)
    B, T = 12, 32                                     # small shapes; F = 17 >= 5
    x = jax.random.normal(key, (B, T), dtype=jnp.float32)

    ref_season, ref_trend = _reference(x)

    # multi-tile path (tb=8 -> 2 batch tiles, incl. padded rows in the last tile)
    season, trend = dft_series_decomp(x, tb=8)
    jax.block_until_ready((season, trend))
    assert season.shape == (B, T) and trend.shape == (B, T)
    assert jnp.allclose(season, ref_season, atol=1e-4), float(
        jnp.max(jnp.abs(season - ref_season)))
    assert jnp.allclose(trend, ref_trend, atol=1e-4), float(
        jnp.max(jnp.abs(trend - ref_trend)))

    # default (single-tile) path
    season2, trend2 = dft_series_decomp(x)
    jax.block_until_ready((season2, trend2))
    assert jnp.allclose(season2, ref_season, atol=1e-4), float(
        jnp.max(jnp.abs(season2 - ref_season)))
    assert jnp.allclose(trend2, ref_trend, atol=1e-4), float(
        jnp.max(jnp.abs(trend2 - ref_trend)))

    print("KERNEL_OK")
</pallas_src>

<mosaic_0001>
module attributes {stable_mosaic.version = 11 : i64} {
  func.func @_rfft_kth_kernel(%arg0: i32, %arg1: memref<8x32xf32, #tpu.memory_space<vmem>>, %arg2: memref<32x256xf32, #tpu.memory_space<vmem>>, %arg3: memref<8x128xf32, #tpu.memory_space<vmem>>) attributes {dimension_semantics = [#tpu.dimension_semantics<parallel>], iteration_bounds = array<i64: 2>, scalar_prefetch = 0 : i64, scratch_operands = 0 : i64, tpu.core_type = #tpu.core_type<tc>, window_params = [{transform_indices = @transform_0, window_bounds = array<i64: 8, 32>}, {pipeline_mode = #tpu.pipeline_mode<synchronous>, transform_indices = @transform_1, window_bounds = array<i64: 32, 256>}, {transform_indices = @transform_2, window_bounds = array<i64: 8, 128>}]} {
    %c0 = arith.constant 0 : index
    %c0_0 = arith.constant 0 : index
    %0 = vector.load %arg1[%c0, %c0_0] : memref<8x32xf32, #tpu.memory_space<vmem>>, vector<8x32xf32>
    %c0_1 = arith.constant 0 : index
    %c0_2 = arith.constant 0 : index
    %1 = vector.load %arg2[%c0_1, %c0_2] : memref<32x256xf32, #tpu.memory_space<vmem>>, vector<32x256xf32>
    %cst = arith.constant dense<0.000000e+00> : vector<8x256xf32>
    %2 = tpu.matmul %0, %1, %cst {dimension_numbers = #tpu.dot_dimension_numbers<[1], [0], [0], [1], [0, 0, 1, 1], [], []>} : vector<8x32xf32>, vector<32x256xf32>, vector<8x256xf32> -> vector<8x256xf32>
    %3 = vector.extract_strided_slice %2 {offsets = [0, 0], sizes = [8, 128], strides = [1, 1]} : vector<8x256xf32> to vector<8x128xf32>
    %4 = vector.extract_strided_slice %2 {offsets = [0, 128], sizes = [8, 128], strides = [1, 1]} : vector<8x256xf32> to vector<8x128xf32>
    %5 = arith.mulf %3, %3 : vector<8x128xf32>
    %6 = arith.mulf %4, %4 : vector<8x128xf32>
    %7 = arith.addf %5, %6 : vector<8x128xf32>
    %8 = tpu.iota {dimensions = array<i32: 0>} : vector<8x128xi32>
    %9 = tpu.iota {dimensions = array<i32: 1>} : vector<8x128xi32>
    %c8_i32 = arith.constant 8 : i32
    %10 = arith.muli %arg0, %c8_i32 : i32
    %11 = vector.broadcast %10 : i32 to vector<8x128xi32>
    %12 = arith.addi %11, %8 : vector<8x128xi32>
    %c0_i32 = arith.constant 0 : i32
    %13 = vector.broadcast %c0_i32 : i32 to vector<8x128xi32>
    %14 = arith.cmpi eq, %12, %13 : vector<8x128xi32>
    %cst_3 = arith.constant 0.000000e+00 : f32
    %15 = vector.broadcast %cst_3 : f32 to vector<8x128xf32>
    %16 = arith.select %14, %15, %7 : vector<8x128xi1>, vector<8x128xf32>
    %c12_i32 = arith.constant 12 : i32
    %17 = vector.broadcast %c12_i32 : i32 to vector<8x128xi32>
    %18 = arith.cmpi sge, %12, %17 : vector<8x128xi32>
    %cst_4 = arith.constant 0x7F800000 : f32
    %19 = vector.broadcast %cst_4 : f32 to vector<8x128xf32>
    %20 = arith.select %18, %19, %16 : vector<8x128xi1>, vector<8x128xf32>
    %cst_5 = arith.constant dense<0xFF800000> : vector<8xf32>
    %21 = vector.multi_reduction <maximumf>, %20, %cst_5 [1] : vector<8x128xf32> to vector<8xf32>
    %22 = vector.shape_cast %21 : vector<8xf32> to vector<8x1xf32>
    %23 = vector.broadcast %22 : vector<8x1xf32> to vector<8x128xf32>
    %24 = arith.cmpf oeq, %20, %23 : vector<8x128xf32>
    %c128_i32 = arith.constant 128 : i32
    %25 = vector.broadcast %c128_i32 : i32 to vector<8x128xi32>
    %26 = arith.select %24, %9, %25 : vector<8x128xi1>, vector<8x128xi32>
    %cst_6 = arith.constant dense<2147483647> : vector<8xi32>
    %27 = vector.multi_reduction <minsi>, %26, %cst_6 [1] : vector<8x128xi32> to vector<8xi32>
    %28 = vector.shape_cast %27 : vector<8xi32> to vector<8x1xi32>
    %29 = vector.broadcast %28 : vector<8x1xi32> to vector<8x128xi32>
    %30 = arith.cmpi eq, %9, %29 : vector<8x128xi32>
    %cst_7 = arith.constant -1.000000e+00 : f32
    %31 = vector.broadcast %cst_7 : f32 to vector<8x128xf32>
    %32 = arith.select %30, %31, %20 : vector<8x128xi1>, vector<8x128xf32>
    %cst_8 = arith.constant dense<0xFF800000> : vector<8xf32>
    %33 = vector.multi_reduction <maximumf>, %32, %cst_8 [1] : vector<8x128xf32> to vector<8xf32>
    %34 = vector.shape_cast %33 : vector<8xf32> to vector<8x1xf32>
    %35 = vector.broadcast %34 : vector<8x1xf32> to vector<8x128xf32>
    %36 = arith.cmpf oeq, %32, %35 : vector<8x128xf32>
    %c128_i32_9 = arith.constant 128 : i32
    %37 = vector.broadcast %c128_i32_9 : i32 to vector<8x128xi32>
    %38 = arith.select %36, %9, %37 : vector<8x128xi1>, vector<8x128xi32>
    %cst_10 = arith.constant dense<2147483647> : vector<8xi32>
    %39 = vector.multi_reduction <minsi>, %38, %cst_10 [1] : vector<8x128xi32> to vector<8xi32>
    %40 = vector.shape_cast %39 : vector<8xi32> to vector<8x1xi32>
    %41 = vector.broadcast %40 : vector<8x1xi32> to vector<8x128xi32>
    %42 = arith.cmpi eq, %9, %41 : vector<8x128xi32>
    %cst_11 = arith.constant -1.000000e+00 : f32
    %43 = vector.broadcast %cst_11 : f32 to vector<8x128xf32>
    %44 = arith.select %42, %43, %32 : vector<8x128xi1>, vector<8x128xf32>
    %cst_12 = arith.constant dense<0xFF800000> : vector<8xf32>
    %45 = vector.multi_reduction <maximumf>, %44, %cst_12 [1] : vector<8x128xf32> to vector<8xf32>
    %46 = vector.shape_cast %45 : vector<8xf32> to vector<8x1xf32>
    %47 = vector.broadcast %46 : vector<8x1xf32> to vector<8x128xf32>
    %48 = arith.cmpf oeq, %44, %47 : vector<8x128xf32>
    %c128_i32_13 = arith.constant 128 : i32
    %49 = vector.broadcast %c128_i32_13 : i32 to vector<8x128xi32>
    %50 = arith.select %48, %9, %49 : vector<8x128xi1>, vector<8x128xi32>
    %cst_14 = arith.constant dense<2147483647> : vector<8xi32>
    %51 = vector.multi_reduction <minsi>, %50, %cst_14 [1] : vector<8x128xi32> to vector<8xi32>
    %52 = vector.shape_cast %51 : vector<8xi32> to vector<8x1xi32>
    %53 = vector.broadcast %52 : vector<8x1xi32> to vector<8x128xi32>
    %54 = arith.cmpi eq, %9, %53 : vector<8x128xi32>
    %cst_15 = arith.constant -1.000000e+00 : f32
    %55 = vector.broadcast %cst_15 : f32 to vector<8x128xf32>
    %56 = arith.select %54, %55, %44 : vector<8x128xi1>, vector<8x128xf32>
    %cst_16 = arith.constant dense<0xFF800000> : vector<8xf32>
    %57 = vector.multi_reduction <maximumf>, %56, %cst_16 [1] : vector<8x128xf32> to vector<8xf32>
    %58 = vector.shape_cast %57 : vector<8xf32> to vector<8x1xf32>
    %59 = vector.broadcast %58 : vector<8x1xf32> to vector<8x128xf32>
    %60 = arith.cmpf oeq, %56, %59 : vector<8x128xf32>
    %c128_i32_17 = arith.constant 128 : i32
    %61 = vector.broadcast %c128_i32_17 : i32 to vector<8x128xi32>
    %62 = arith.select %60, %9, %61 : vector<8x128xi1>, vector<8x128xi32>
    %cst_18 = arith.constant dense<2147483647> : vector<8xi32>
    %63 = vector.multi_reduction <minsi>, %62, %cst_18 [1] : vector<8x128xi32> to vector<8xi32>
    %64 = vector.shape_cast %63 : vector<8xi32> to vector<8x1xi32>
    %65 = vector.broadcast %64 : vector<8x1xi32> to vector<8x128xi32>
    %66 = arith.cmpi eq, %9, %65 : vector<8x128xi32>
    %cst_19 = arith.constant -1.000000e+00 : f32
    %67 = vector.broadcast %cst_19 : f32 to vector<8x128xf32>
    %68 = arith.select %66, %67, %56 : vector<8x128xi1>, vector<8x128xf32>
    %cst_20 = arith.constant dense<0xFF800000> : vector<8xf32>
    %69 = vector.multi_reduction <maximumf>, %68, %cst_20 [1] : vector<8x128xf32> to vector<8xf32>
    %70 = vector.shape_cast %69 : vector<8xf32> to vector<8x1xf32>
    %cst_21 = arith.constant 0.000000e+00 : f32
    %71 = vector.broadcast %cst_21 : f32 to vector<8x128xf32>
    %72 = vector.shape_cast %70 : vector<8x1xf32> to vector<1x8x1xf32>
    %cst_22 = arith.constant dense<0x7F800000> : vector<1xf32>
    %73 = vector.multi_reduction <minimumf>, %72, %cst_22 [1, 2] : vector<1x8x1xf32> to vector<1xf32>
    %74 = vector.shape_cast %73 : vector<1xf32> to vector<1x1x1xf32>
    %75 = vector.extract %74[0, 0, 0] : f32 from vector<1x1x1xf32>
    %76 = vector.broadcast %75 : f32 to vector<8x128xf32>
    %77 = arith.addf %71, %76 : vector<8x128xf32>
    %c0_23 = arith.constant 0 : index
    %c0_24 = arith.constant 0 : index
    %78 = vector.load %arg3[%c0_23, %c0_24] : memref<8x128xf32, #tpu.memory_space<vmem>>, vector<8x128xf32>
    tpu.vector_store %arg3[%c0_23, %c0_24], %77 {strides = array<i32>} : memref<8x128xf32, #tpu.memory_space<vmem>>, vector<8x128xf32>,
    return
  }
  func.func @transform_0(%arg0: i32) -> (i32, i32) {
    %c0_i32 = arith.constant 0 : i32
    %c0_i32_0 = arith.constant 0 : i32
    return %arg0, %c0_i32 : i32, i32
  }
  func.func @transform_1(%arg0: i32) -> (i32, i32) {
    %c0_i32 = arith.constant 0 : i32
    %c0_i32_0 = arith.constant 0 : i32
    %c0_i32_1 = arith.constant 0 : i32
    return %c0_i32, %c0_i32_0 : i32, i32
  }
  func.func @transform_2(%arg0: i32) -> (i32, i32) {
    %c0_i32 = arith.constant 0 : i32
    %c0_i32_0 = arith.constant 0 : i32
    return %arg0, %c0_i32 : i32, i32
  }
}

</mosaic_0001>

<llo_original>
// kernel: tpu_custom_call.1
$region0: #{tpu_custom_call.1}
  #allocation0 [shape = 'u32[]', space=smem, size = 0x4, offset = 0x4, fixed_abs, tag = 'smem constant byte address 0x4 - core index']
  #allocation1 [shape = 'u32[144,128]{1,0:T(1,128)}', space=vmem, size = 0x12000, scoped, tag = 'internal scratch']
  %s0 = inlined_call_operand.hbm [shape: f32[16,32], index: 0, kind: input, shape index: {}]
  %s1 = inlined_call_operand.hbm [shape: f32[32,256], index: 1, kind: input, shape index: {}]
  %s2 = inlined_call_operand.hbm [shape: f32[16,128], index: 2, kind: output, shape index: {}]
  %s3 = sld [smem:[#allocation0]]
  $region49: #{tpu_custom_call.1} parent=0
    _
  %s5 = ssub.s32 1, %s3
  %s6 = scalar_select 0, %s5, %s3
  $region1: #{tpu_custom_call.1} parent=0
    #allocation2 [shape = 'u8[8192]{0}', space=vmem, size = 0x2000, scoped, tag = 'input window, operand 0']
    #allocation3 [shape = 's32[2]{0}', space=sflag, size = 0x8, scoped, tag = 'scoped memory for tpu_custom_call.1']
    #allocation4 [shape = 's32[2]{0}', space=sflag, size = 0x8, scoped, tag = 'scoped memory for tpu_custom_call.1']
    #allocation5 [shape = 'u8[32768]{0}', space=vmem, size = 0x8000, scoped, tag = 'input window, operand 1, single buffered']
    #allocation6 [shape = 's32[1]{0}', space=sflag, size = 0x4, scoped, tag = 'scoped memory for tpu_custom_call.1']
    #allocation7 [shape = 'u8[8192]{0}', space=vmem, size = 0x2000, scoped, tag = 'output window, operand 0']
    %7 = vsyncpa [#allocation3], 0
    %s8 = scalar_lea.sflag [#allocation3], 1
    %9 = vsyncpa %s8, 0
    %10 = vsyncpa [#allocation6], 0
    %11 = vsyncpa [#allocation4], 0
    %s12 = scalar_lea.sflag [#allocation4], 1
    %13 = vsyncpa %s12, 0
    loop: start=0, step=1, limit=4
    $region2: #{tpu_custom_call.1} parent=1 // loop_pre_header
      _
    $region3: #{tpu_custom_call.1} parent=1 // loop_header
      %s15 = sphi 0, %s19
      %p16 = scmp.ge.s32.totalorder %s15, 4
      %s25 = sphi 0, %s27
      %s28 = sphi 0, %s25
      %s29 = sphi 0, %s28
      %s45 = sphi 0, %s29
      %s49 = sphi 0, %s49
      %s51 = sphi 0, %s49
      %s52 = sphi 0, %s51
      %s66 = sphi 0, %s52
      %s72 = sphi 0, %s74
      %s75 = sphi 0, %s72
      %s76 = sphi 0, %s75
      %s92 = sphi 0, %s76
    $region4: #{tpu_custom_call.1} parent=1 // loop_header_branch
      %18 = sbr.rel (%p16) target = $region8
    $region5: #{tpu_custom_call.1} parent=1 // loop_body
      %s20 = ssub.s32 %s15, 1
      %s21 = ssub.s32 %s15, 2
      %s22 = sadd.s32 %s15, 1
      %s23 = ssub.s32 %s15, %s22
      %p24 = scmp.eq.s32.totalorder %s23, 0
      %s26 = sadd.s32 %s25, 1
      %s27 = scalar_select %p24, %s25, %s26
      %p30 = pneg %p24
      %p31 = scmp.eq.s32.totalorder %s15, 1
      %p32 = por %p30, %p31
      %p33 = scmp.ne.s32.totalorder %s25, %s28
      %p34 = scmp.eq.s32.totalorder %s15, 0
      %p35 = por %p33, %p34
      %p36 = scmp.ne.s32.totalorder %s25, %s28
      %p37 = scmp.eq.s32.totalorder %s20, 1
      %p38 = por %p36, %p37
      %p39 = scmp.ne.s32.totalorder %s28, %s29
      %p40 = scmp.eq.s32.totalorder %s20, 0
      %p41 = por %p39, %p40
      %p42 = scmp.ne.s32.totalorder %s28, %s29
      %p43 = scmp.eq.s32.totalorder %s21, 1
      %p44 = por %p42, %p43
      %p46 = scmp.ne.s32.totalorder %s29, %s45
      %p47 = scmp.eq.s32.totalorder %s21, 0
      %p48 = por %p46, %p47
      %s50 = sadd.s32 %s49, 1
      %p53 = scmp.eq.s32.totalorder %s15, 1
      %p54 = scmp.ne.s32.totalorder %s49, %s51
      %p55 = scmp.eq.s32.totalorder %s15, 0
      %p56 = por %p54, %p55
      %p57 = scmp.ne.s32.totalorder %s49, %s51
      %p58 = scmp.eq.s32.totalorder %s20, 1
      %p59 = por %p57, %p58
      %p60 = scmp.ne.s32.totalorder %s51, %s52
      %p61 = scmp.eq.s32.totalorder %s20, 0
      %p62 = por %p60, %p61
      %p63 = scmp.ne.s32.totalorder %s51, %s52
      %p64 = scmp.eq.s32.totalorder %s21, 1
      %p65 = por %p63, %p64
      %p67 = scmp.ne.s32.totalorder %s52, %s66
      %p68 = scmp.eq.s32.totalorder %s21, 0
      %p69 = por %p67, %p68
      %s70 = ssub.s32 %s15, %s22
      %p71 = scmp.eq.s32.totalorder %s70, 0
      %s73 = sadd.s32 %s72, 1
      %s74 = scalar_select %p71, %s72, %s73
      %p77 = pneg %p71
      %p78 = scmp.eq.s32.totalorder %s15, 1
      %p79 = por %p77, %p78
      %p80 = scmp.ne.s32.totalorder %s72, %s75
      %p81 = scmp.eq.s32.totalorder %s15, 0
      %p82 = por %p80, %p81
      %p83 = scmp.ne.s32.totalorder %s72, %s75
      %p84 = scmp.eq.s32.totalorder %s20, 1
      %p85 = por %p83, %p84
      %p86 = scmp.ne.s32.totalorder %s75, %s76
      %p87 = scmp.eq.s32.totalorder %s20, 0
      %p88 = por %p86, %p87
      %p89 = scmp.ne.s32.totalorder %s75, %s76
      %p90 = scmp.eq.s32.totalorder %s21, 1
      %p91 = por %p89, %p90
      %p93 = scmp.ne.s32.totalorder %s76, %s92
      %p94 = scmp.eq.s32.totalorder %s21, 0
      %p95 = por %p93, %p94
      %p96 = scmp.le.s32.totalorder 1, %s15
      %p97 = scmp.lt.s32.totalorder %s15, 3
      %p98 = pnand %p96, %p97
      %p99 = pneg %p98
      // Predicated region
      $region9: #{tpu_custom_call.1} parent=5 // pred_check
        _
      $region10: #{tpu_custom_call.1} parent=5 // pred_check_branch
        %101 = sbr.rel (%p98) target = $region12
      $region11: #{tpu_custom_call.1} parent=5 // pred_region
        %s102 = ssub.s32 %s15, 1
        // Predicated region
        $region13: #{tpu_custom_call.1} parent=11 // pred_check
          %p103 = pneg %p62
        $region14: #{tpu_custom_call.1} parent=11 // pred_check_branch
          %105 = sbr.rel (%p103) target = $region16
        $region15: #{tpu_custom_call.1} parent=11 // pred_region
          %s107 = ssub.s32 1024, 1024
          %108 = vsyncadd [#allocation6], %s107
          %s109 = sshll.u32 [#allocation5], 4
          %s110 = int_to_ptr.vmem [resolvable:$true] %s109
          %115 = dma.hbm_to_vmem [thread:$0]  %s1, 1024, %s110, [#allocation6], 256, 256, 16
        $region16: #{tpu_custom_call.1} parent=11 // pred_fallthru
          _
      $region12: #{tpu_custom_call.1} parent=5 // pred_fallthru
        _
      %p116 = scmp.lt.s32.totalorder %s15, 2
      // Predicated region
      $region17: #{tpu_custom_call.1} parent=5 // pred_check
        %p117 = pneg %p116
      $region18: #{tpu_custom_call.1} parent=5 // pred_check_branch
        %119 = sbr.rel (%p117) target = $region20
      $region19: #{tpu_custom_call.1} parent=5 // pred_region
        // Predicated region
        $region21: #{tpu_custom_call.1} parent=19 // pred_check
          %p120 = pneg %p35
        $region22: #{tpu_custom_call.1} parent=19 // pred_check_branch
          %122 = sbr.rel (%p120) target = $region24
        $region23: #{tpu_custom_call.1} parent=19 // pred_region
          %s123 = sand.u32 %s25, 1
          %s124 = scalar_lea.sflag [#allocation3], %s123
          %s125 = sand.u32 %s25, 1
          %s126 = smul.addr %s125, 8
          %s127 = scalar_lea.vmem [#allocation2], %s126
          %s129 = ssub.s32 128, 128
          %130 = vsyncadd %s124, %s129
          %s131 = smul.addr %s15, 128
          %s132 = scalar_lea.hbm %s0, %s131
          %s134 = sshll.u32 %s127, 4
          %s135 = int_to_ptr.vmem [resolvable:$true] %s134
          %137 = dma.hbm_to_vmem [thread:$0]  %s132, 128, %s135, %s124
        $region24: #{tpu_custom_call.1} parent=19 // pred_fallthru
          _
      $region20: #{tpu_custom_call.1} parent=5 // pred_fallthru
        _
      %p138 = scmp.le.s32.totalorder 1, %s15
      %p139 = scmp.lt.s32.totalorder %s15, 3
      %p140 = pnand %p138, %p139
      %p141 = pneg %p140
      // Predicated region
      $region25: #{tpu_custom_call.1} parent=5 // pred_check
        _
      $region26: #{tpu_custom_call.1} parent=5 // pred_check_branch
        %143 = sbr.rel (%p140) target = $region28
      $region27: #{tpu_custom_call.1} parent=5 // pred_region
        %s144 = ssub.s32 %s15, 1
        %s145 = sand.u32 %s28, 1
        %s146 = scalar_lea.sflag [#allocation3], %s145
        %s147 = sand.u32 %s28, 1
        %s148 = smul.addr %s147, 8
        %s149 = scalar_lea.vmem [#allocation2], %s148
        // Predicated region
        $region29: #{tpu_custom_call.1} parent=27 // pred_check
          %p150 = pneg %p41
        $region30: #{tpu_custom_call.1} parent=27 // pred_check_branch
          %152 = sbr.rel (%p150) target = $region32
        $region31: #{tpu_custom_call.1} parent=27 // pred_region
          %153 = dma.done %s146, 128
        $region32: #{tpu_custom_call.1} parent=27 // pred_fallthru
          _
        // Predicated region
        $region33: #{tpu_custom_call.1} parent=27 // pred_check
          %p154 = pneg %p62
        $region34: #{tpu_custom_call.1} parent=27 // pred_check_branch
          %156 = sbr.rel (%p154) target = $region36
        $region35: #{tpu_custom_call.1} parent=27 // pred_region
          %157 = dma.done [#allocation6], 1024
        $region36: #{tpu_custom_call.1} parent=27 // pred_fallthru
          _
        %s158 = sand.u32 %s28, 1
        %s159 = scalar_lea.sflag [#allocation3], %s158
        %s160 = sand.u32 %s28, 1
        %s161 = smul.addr %s160, 8
        %s162 = scalar_lea.vmem [#allocation2], %s161
        %p163 = pneg %p41
        %p164 = pneg %p38
        %p165 = pneg %p62
        %p166 = pneg %p59
        %p167 = pneg %p88
        %p168 = pneg %p85
        %s169 = sand.u32 %s75, 1
        %s170 = scalar_lea.sflag [#allocation4], %s169
        %s171 = sand.u32 %s75, 1
        %s172 = smul.addr %s171, 8
        %s173 = scalar_lea.vmem [#allocation7], %s172
        %v174 = vld [vmem:[%s149] sm:$0xff]
        %v175 = vld [vmem:[#allocation5] sm:$0xff]
        %v176 = vld [vmem:[#allocation5 + $0x8] sm:$0xff]
        %v177 = vld [vmem:[#allocation5 + $0x10] sm:$0xff]
        %v178 = vld [vmem:[#allocation5 + $0x18] sm:$0xff]
        %v179 = vld [vmem:[#allocation5 + $0x20] sm:$0xff]
        %v180 = vld [vmem:[#allocation5 + $0x28] sm:$0xff]
        %v181 = vld [vmem:[#allocation5 + $0x30] sm:$0xff]
        %v182 = vld [vmem:[#allocation5 + $0x38] sm:$0xff]
        %vm183 = vcmask 261120
        %v185 = vsel %vm183, %v174, 0
        %187 = vmatprep.subr.mxu0 %v176
        %188 = vmatpush1.msra.mxu0 %v175
        %189 = vmatprep.subr.mxu0 %v178
        %190 = vmatpush1.msra.mxu0 %v177
        %191 = vmatprep.subr.mxu0 %v180
        %192 = vmatpush1.msra.mxu0 %v179
        %193 = vmatprep.subr.mxu0 %v182
        %194 = vmatpush1.msra.mxu0 %v181
        %195 = vmatprep.subr.mxu0 0.0
        %196 = vmatpush1.msra.mxu0 0.0
        %197 = vmatprep.subr.mxu0 0.0
        %198 = vmatpush1.msra.mxu0 0.0
        %199 = vmatprep.subr.mxu0 0.0
        %200 = vmatpush1.msra.mxu0 0.0
        %201 = vmatprep.subr.mxu0 0.0
        %202 = vmatpush1.msra.mxu0 0.0
        %203 = vmatprep.subr.mxu0 0.0
        %204 = vmatpush1.msra.mxu0 0.0
        %205 = vmatprep.subr.mxu0 0.0
        %206 = vmatpush1.msra.mxu0 0.0
        %207 = vmatprep.subr.mxu0 0.0
        %208 = vmatpush1.msra.mxu0 0.0
        %209 = vmatprep.subr.mxu0 0.0
        %210 = vmatpush1.msra.mxu0 0.0
        %211 = vmatprep.subr.mxu0 0.0
        %212 = vmatpush1.msra.mxu0 0.0
        %213 = vmatprep.subr.mxu0 0.0
        %214 = vmatpush1.msra.mxu0 0.0
        %215 = vmatprep.subr.mxu0 0.0
        %216 = vmatpush1.msra.mxu0 0.0
        %217 = vmatprep.subr.mxu0 0.0
        %218 = vmatpush1.msra.mxu0 0.0
        %219 = vmatprep.subr.mxu0 0.0
        %220 = vmatpush1.msra.mxu0 0.0
        %221 = vmatprep.subr.mxu0 0.0
        %222 = vmatpush1.msra.mxu0 0.0
        %223 = vmatprep.subr.mxu0 0.0
        %224 = vmatpush1.msra.mxu0 0.0
        %225 = vmatprep.subr.mxu0 0.0
        %226 = vmatpush1.msra.mxu0 0.0
        %227 = vmatprep.subr.mxu0 0.0
        %228 = vmatpush1.msra.mxu0 0.0
        %229 = vmatprep.subr.mxu0 0.0
        %230 = vmatpush1.msra.mxu0 0.0
        %231 = vmatprep.subr.mxu0 0.0
        %232 = vmatpush1.msra.mxu0 0.0
        %233 = vmatprep.subr.mxu0 0.0
        %234 = vmatpush1.msra.mxu0 0.0
        %235 = vmatprep.subr.mxu0 0.0
        %236 = vmatpush1.msra.mxu0 0.0
        %237 = vmatprep.subr.mxu0 0.0
        %238 = vmatpush1.msra.mxu0 0.0
        %239 = vmatprep.subr.mxu0 0.0
        %240 = vmatpush1.msra.mxu0 0.0
        %241 = vmatprep.subr.mxu0 0.0
        %242 = vmatpush1.msra.mxu0 0.0
        %243 = vmatprep.subr.mxu0 0.0
        %244 = vmatpush1.msra.mxu0 0.0
        %245 = vmatprep.subr.mxu0 0.0
        %246 = vmatpush1.msra.mxu0 0.0
        %247 = vmatprep.subr.mxu0 0.0
        %248 = vmatpush1.msra.mxu0 0.0
        %249 = vmatprep.subr.mxu0 0.0
        %250 = vmatpush1.msra.mxu0 0.0
        %251 = vmatprep.mubr.f32.mxu0 0.0
        %252 = vmatmul.mubr.f32.gmra.mrb[0].mxu0 %v185
        %v253 = vpop.f32.mrb[0].mxu0
        %v254 = vadd.f32 0.0, %v253
        %v255 = vpop.f32.mrb[0].mxu0
        %v256 = vadd.f32 0.0, %v255
        %257 = vdwg.mxu0
        %v258 = vmul.f32 %v254, %v254
        %v259 = vmul.f32 %v256, %v256
        %v260 = vadd.f32 %v258, %v259
        %v261 = vlaneseq
        %v262 = vshrl.u32 %v261, 7
        %v263 = vlaneseq
        %v264 = vand.u32 %v263, 127
        %s265 = smul.u32 %s20, 8
        %v266 = vstv %s265
        %v267 = vadd.s32 %v266, %v262
        %vm268 = vcmp.eq.s32.totalorder %v267, 0
        %v269 = vsel %vm268, 0.0, %v260
        %vm270 = vcmp.ge.s32.totalorder %v267, 12
        %v271 = vsel %vm270, inf, %v269
        %272 = vmax.xlane.f32.xlu0 %v271
        %v273 = vpop.xlane.xlu0 %272
        %vm274 = vcmp.eq.f32.partialorder %v271, %v273
        %v275 = vsel %vm274, %v264, 128
        %v276 = vand.u32 %v275, 65535
        %v277 = vshra.s32 %v275, 16
        %v278 = vcvt.s32.f32 %v276
        %v279 = vcvt.s32.f32 %v277
        %280 = vmin.xlane.f32.xlu0 %v279
        %v281 = vpop.xlane.xlu0 %280
        %vm282 = vcmp.eq.f32.partialorder %v279, %v281
        %v283 = vsel %vm282, %v278, inf
        %284 = vmin.xlane.f32.xlu0 %v283
        %v285 = vpop.xlane.xlu0 %284
        %v286 = vcvt.f32.s32 %v285
        %v287 = vcvt.f32.s32 %v281
        %v288 = vshll.u32 %v287, 16
        %v289 = vadd.s32 %v288, %v286
        %vm290 = vcmp.eq.s32.totalorder %v264, %v289
        %v291 = vsel %vm290, -1.0, %v271
        %292 = vmax.xlane.f32.xlu0 %v291
        %v293 = vpop.xlane.xlu0 %292
        %vm294 = vcmp.eq.f32.partialorder %v291, %v293
        %v295 = vsel %vm294, %v264, 128
        %v296 = vand.u32 %v295, 65535
        %v297 = vshra.s32 %v295, 16
        %v298 = vcvt.s32.f32 %v296
        %v299 = vcvt.s32.f32 %v297
        %300 = vmin.xlane.f32.xlu0 %v299
        %v301 = vpop.xlane.xlu0 %300
        %vm302 = vcmp.eq.f32.partialorder %v299, %v301
        %v303 = vsel %vm302, %v298, inf
        %304 = vmin.xlane.f32.xlu0 %v303
        %v305 = vpop.xlane.xlu0 %304
        %v306 = vcvt.f32.s32 %v305
        %v307 = vcvt.f32.s32 %v301
        %v308 = vshll.u32 %v307, 16
        %v309 = vadd.s32 %v308, %v306
        %vm310 = vcmp.eq.s32.totalorder %v264, %v309
        %v311 = vsel %vm310, -1.0, %v291
        %312 = vmax.xlane.f32.xlu0 %v311
        %v313 = vpop.xlane.xlu0 %312
        %vm314 = vcmp.eq.f32.partialorder %v311, %v313
        %v315 = vsel %vm314, %v264, 128
        %v316 = vand.u32 %v315, 65535
        %v317 = vshra.s32 %v315, 16
        %v318 = vcvt.s32.f32 %v316
        %v319 = vcvt.s32.f32 %v317
        %320 = vmin.xlane.f32.xlu0 %v319
        %v321 = vpop.xlane.xlu0 %320
        %vm322 = vcmp.eq.f32.partialorder %v319, %v321
        %v323 = vsel %vm322, %v318, inf
        %324 = vmin.xlane.f32.xlu0 %v323
        %v325 = vpop.xlane.xlu0 %324
        %v326 = vcvt.f32.s32 %v325
        %v327 = vcvt.f32.s32 %v321
        %v328 = vshll.u32 %v327, 16
        %v329 = vadd.s32 %v328, %v326
        %vm330 = vcmp.eq.s32.totalorder %v264, %v329
        %v331 = vsel %vm330, -1.0, %v311
        %332 = vmax.xlane.f32.xlu0 %v331
        %v333 = vpop.xlane.xlu0 %332
        %vm334 = vcmp.eq.f32.partialorder %v331, %v333
        %v335 = vsel %vm334, %v264, 128
        %v336 = vand.u32 %v335, 65535
        %v337 = vshra.s32 %v335, 16
        %v338 = vcvt.s32.f32 %v336
        %v339 = vcvt.s32.f32 %v337
        %340 = vmin.xlane.f32.xlu0 %v339
        %v341 = vpop.xlane.xlu0 %340
        %vm342 = vcmp.eq.f32.partialorder %v339, %v341
        %v343 = vsel %vm342, %v338, inf
        %344 = vmin.xlane.f32.xlu0 %v343
        %v345 = vpop.xlane.xlu0 %344
        %v346 = vcvt.f32.s32 %v345
        %v347 = vcvt.f32.s32 %v341
        %v348 = vshll.u32 %v347, 16
        %v349 = vadd.s32 %v348, %v346
        %vm350 = vcmp.eq.s32.totalorder %v264, %v349
        %v351 = vsel %vm350, -1.0, %v331
        %352 = vmax.xlane.f32.xlu0 %v351
        %v353 = vpop.xlane.xlu0 %352
        %v354 = vrot.slane %v353, 4
        %v355 = vmin.f32 %v353, %v354
        %v356 = vrot.slane %v355, 2
        %v357 = vmin.f32 %v355, %v356
        %v358 = vrot.slane %v357, 1
        %v359 = vmin.f32 %v357, %v358
        %s360 = vtos %v359
        %v361 = vstv %s360
        %v362 = vadd.f32 %v361, 0.0
        %363 = vst [vmem:[%s173] sm:$0xff] %v362
        %s364 = sand.u32 %s75, 1
        %s365 = scalar_lea.sflag [#allocation4], %s364
        %s366 = sand.u32 %s75, 1
        %s367 = smul.addr %s366, 8
        %s368 = scalar_lea.vmem [#allocation7], %s367
        // Predicated region
        $region37: #{tpu_custom_call.1} parent=27 // pred_check
          %p369 = pneg %p85
        $region38: #{tpu_custom_call.1} parent=27 // pred_check_branch
          %371 = sbr.rel (%p369) target = $region40
        $region39: #{tpu_custom_call.1} parent=27 // pred_region
          %s373 = ssub.s32 128, 128
          %374 = vsyncadd %s365, %s373
          %s375 = smul.addr %s20, 128
          %s376 = scalar_lea.hbm %s2, %s375
          %s378 = sshll.u32 %s368, 4
          %s379 = int_to_ptr.vmem [resolvable:$true] %s378
          %381 = dma.vmem_to_hbm [thread:$0]  %s379, 128, %s376, %s365
        $region40: #{tpu_custom_call.1} parent=27 // pred_fallthru
          _
      $region28: #{tpu_custom_call.1} parent=5 // pred_fallthru
        _
      %p382 = scmp.le.s32.totalorder 2, %s15
      // Predicated region
      $region41: #{tpu_custom_call.1} parent=5 // pred_check
        %p383 = pneg %p382
      $region42: #{tpu_custom_call.1} parent=5 // pred_check_branch
        %385 = sbr.rel (%p383) target = $region44
      $region43: #{tpu_custom_call.1} parent=5 // pred_region
        %s386 = ssub.s32 %s15, 2
        // Predicated region
        $region45: #{tpu_custom_call.1} parent=43 // pred_check
          %p387 = pneg %p91
        $region46: #{tpu_custom_call.1} parent=43 // pred_check_branch
          %389 = sbr.rel (%p387) target = $region48
        $region47: #{tpu_custom_call.1} parent=43 // pred_region
          %s390 = sand.u32 %s76, 1
          %s391 = scalar_lea.sflag [#allocation4], %s390
          %s392 = sand.u32 %s76, 1
          %s393 = smul.addr %s392, 8
          %s394 = scalar_lea.vmem [#allocation7], %s393
          %395 = dma.done %s391, 128
        $region48: #{tpu_custom_call.1} parent=43 // pred_fallthru
          _
      $region44: #{tpu_custom_call.1} parent=5 // pred_fallthru
        _
    $region6: #{tpu_custom_call.1} parent=1 // loop_footer
      %s19 = sadd.s32 1, %s15
    $region7: #{tpu_custom_call.1} parent=1 // loop_footer_branch
      %14 = sbr.rel target = $region3
    $region8: #{tpu_custom_call.1} parent=1 // loop_exit
      _
    %396 = vsyncpa [#allocation3], 1
    %s397 = scalar_lea.sflag [#allocation3], 1
    %398 = vsyncpa %s397, 1
    %399 = vsyncpa [#allocation6], 1
    %400 = vsyncpa [#allocation4], 1
    %s401 = scalar_lea.sflag [#allocation4], 1
    %402 = vsyncpa %s401, 1

</llo_original>
